<compile_context>
chip_gen: v6e
topology: v6e:2x2x1
jax: 0.10.0
libtpu: 0.0.40
codegen_flags: <defaults>
</compile_context>

<pallas_src>
import functools

import jax
import jax.numpy as jnp
from jax.experimental import pallas as pl
from jax.experimental.pallas import tpu as pltpu

_LANES = 128
_SUBLANES = 8
_MAX_TR = 1024  # rows of 128 lanes per tile (0.5 MiB f32 depth tile); v7x-safe


# ---------------------------------------------------------------------------
# Pallas kernels: fused induced-flow.
# Per (row-tile, n*f) grid step, for each focal-length candidate ci:
#   r = M_ci @ [x, y, 1] * depth + b_ci   (fused on the JAX side)
#   z = max(r_z, 0.01);  u,v = clip(r_xy / z, -2, 2);  flow = (u,v) - (x,y)
# ---------------------------------------------------------------------------
def _recip(z):
    # approx reciprocal on the EUP slot + one Newton step (keeps ~f32 accuracy)
    inv = pl.reciprocal(z, approx=True)
    return inv * (2.0 - z * inv)


def _induce_flow_kernel_generic(params_ref, xgyg_ref, depth_ref, flow_ref, *,
                                num_candidates, out_dtype):
    """Generic per-candidate (M, b) map: 12 scalars per (n,f,candidate)."""
    b = pl.program_id(1)                      # n*f index (inner grid axis)
    xg = xgyg_ref[0]                          # (TR, 128)
    yg = xgyg_ref[1]
    d = depth_ref[0]
    base = b * (num_candidates * 12)

    # TODO(synk): if num_candidates grows past ~8, strip-mine this loop
    # (lax.fori_loop) instead of a static unroll to bound live ranges.
    for ci in range(num_candidates):          # static unroll; depth tile reused
        o = base + ci * 12
        m00 = params_ref[o + 0]
        m01 = params_ref[o + 1]
        m02 = params_ref[o + 2]
        m10 = params_ref[o + 3]
        m11 = params_ref[o + 4]
        m12 = params_ref[o + 5]
        m20 = params_ref[o + 6]
        m21 = params_ref[o + 7]
        m22 = params_ref[o + 8]
        t0 = params_ref[o + 9]
        t1 = params_ref[o + 10]
        t2 = params_ref[o + 11]

        rx = (m00 * xg + m01 * yg + m02) * d + t0
        ry = (m10 * xg + m11 * yg + m12) * d + t1
        rz = (m20 * xg + m21 * yg + m22) * d + t2

        zc = jnp.maximum(rz, 0.01)
        inv_z = _recip(zc)
        u = jnp.clip(rx * inv_z, -2.0, 2.0)
        v = jnp.clip(ry * inv_z, -2.0, 2.0)

        flow_ref[0, ci, 0] = (u - xg).astype(out_dtype)
        flow_ref[0, ci, 1] = (v - yg).astype(out_dtype)


def _induce_flow_kernel_diag(params_ref, xgyg_ref, depth_ref, flow_ref, *,
                             num_candidates, out_dtype):
    """Diagonal-K fast path (shared rotation across candidates).

    Candidate-invariant hoisted vectors:
      xd = x*d, yd = y*d
      S_x = R00*xd + (R01/ar)*yd
      S_y = (R10*ar)*xd + R11*yd
      S_z = R20*xd + (R21/ar)*yd
      Z0  = R22*d
    Per candidate (scalars only):
      rx = a_x*d + S_x + b_x,  ry = a_y*d + S_y + b_y,  rz = g*S_z + Z0 + t2
    """
    b = pl.program_id(1)
    xg = xgyg_ref[0]
    yg = xgyg_ref[1]
    d = depth_ref[0]
    stride = 8 + num_candidates * 6
    base = b * stride

    r00 = params_ref[base + 0]
    r01a = params_ref[base + 1]
    r10a = params_ref[base + 2]
    r11 = params_ref[base + 3]
    r20 = params_ref[base + 4]
    r21a = params_ref[base + 5]
    r22 = params_ref[base + 6]

    xd = xg * d
    yd = yg * d
    s_x = r00 * xd + r01a * yd
    s_y = r10a * xd + r11 * yd
    s_z = r20 * xd + r21a * yd
    z0 = r22 * d

    # TODO(synk): strip-mine if num_candidates grows past ~8 (live ranges).
    for ci in range(num_candidates):
        o = base + 8 + ci * 6
        a_x = params_ref[o + 0]
        b_x = params_ref[o + 1]
        a_y = params_ref[o + 2]
        b_y = params_ref[o + 3]
        g = params_ref[o + 4]
        t2 = params_ref[o + 5]

        rx = a_x * d + s_x + b_x
        ry = a_y * d + s_y + b_y
        rz = g * s_z + z0 + t2

        zc = jnp.maximum(rz, 0.01)
        inv_z = _recip(zc)
        u = jnp.clip(rx * inv_z, -2.0, 2.0)
        v = jnp.clip(ry * inv_z, -2.0, 2.0)

        flow_ref[0, ci, 0] = (u - xg).astype(out_dtype)
        flow_ref[0, ci, 1] = (v - yg).astype(out_dtype)


def _row_tiling(hw):
    """Lane-dense row tiling of the flattened pixel axis, sublane-aligned."""
    r_rows = -(-hw // _LANES)
    r_rows = -(-r_rows // _SUBLANES) * _SUBLANES     # full (8,128) vregs
    if r_rows <= _MAX_TR:
        tr, nrt = r_rows, 1
    else:
        tr = _MAX_TR
        nrt = -(-r_rows // tr)
    rp = nrt * tr
    return tr, nrt, rp


def _mosaic_params(tr, c, out_itemsize):
    depth_b = tr * _LANES * 4
    xy_b = 2 * tr * _LANES * 4
    out_b = c * 2 * tr * _LANES * out_itemsize
    need = 2 * (depth_b + xy_b + out_b) + (2 << 20)   # double-buffered + margin
    vmem_limit = int(min(max(need, 32 << 20), 48 << 20))
    return pltpu.CompilerParams(
        dimension_semantics=("parallel", "parallel"),
        vmem_limit_bytes=vmem_limit)


def induced_flow_pallas(kernel, params_flat, xy_tiles, depth_tiles,
                        num_candidates, tr, out_dtype):
    """depth_tiles: (NF, Rp, 128); xy_tiles: (2, Rp, 128); params: flat 1-D."""
    nf, rp, lanes = depth_tiles.shape
    nrt = rp // tr
    c = num_candidates
    return pl.pallas_call(
        kernel,
        out_shape=jax.ShapeDtypeStruct((nf, c, 2, rp, lanes), out_dtype),
        grid=(nrt, nf),
        in_specs=[
            # fused scalars, flat 1-D in SMEM (no 2-D SMEM padding waste)
            pl.BlockSpec(memory_space=pltpu.MemorySpace.SMEM),
            # normalized pixel grid: constant block index across the inner NF
            # axis -> DMA'd once per row tile, stays VMEM-resident
            pl.BlockSpec((2, tr, lanes), lambda r, b: (0, r, 0)),
            # one depth tile per (n*f, row-tile); NO candidate broadcast in HBM
            pl.BlockSpec((1, tr, lanes), lambda r, b: (b, r, 0)),
        ],
        out_specs=pl.BlockSpec((1, c, 2, tr, lanes),
                               lambda r, b: (b, 0, 0, r, 0)),
        compiler_params=_mosaic_params(tr, c, jnp.dtype(out_dtype).itemsize),
    )(params_flat, xy_tiles, depth_tiles)


# ---------------------------------------------------------------------------
# JAX equivalents of the helper functions (glue; tiny matrix setup only)
# ---------------------------------------------------------------------------
def make_proj_from_focal_length(focal_length, aspect_ratio=1.0):
    shape = focal_length.shape
    proj = jnp.zeros(shape + (3, 3), dtype=jnp.float32)
    proj = proj.at[..., 0, 0].set(focal_length)
    proj = proj.at[..., 1, 1].set(focal_length * aspect_ratio)
    proj = proj.at[..., 2, 2].set(1.0)
    return proj


def normalize_proj(projs, h, w):
    projs = projs.astype(jnp.float32)
    projs = projs.at[..., 0, 0].set(projs[..., 0, 0] / w * 2)
    projs = projs.at[..., 1, 1].set(projs[..., 1, 1] / h * 2)
    projs = projs.at[..., 0, 2].set(projs[..., 0, 2] / w * 2 - 1)
    projs = projs.at[..., 1, 2].set(projs[..., 1, 2] / h * 2 - 1)
    return projs


def _generic_params(projs, rel_poses, n, f, c):
    """Fused per-(n,f,candidate) map: M = K T[:3,:3] K^-1, b = K T[:3,3]."""
    P = projs.astype(jnp.float32)                                   # (n,C,3,3)
    invP = jnp.linalg.inv(P)                                        # torch.inverse
    T = jnp.broadcast_to(rel_poses.reshape(n, f, -1, 4, 4),
                         (n, f, c, 4, 4)).astype(jnp.float32)
    M = jnp.einsum("ncij,nfcjk,nckl->nfcil", P, T[..., :3, :3], invP)
    bvec = jnp.einsum("ncij,nfcj->nfci", P, T[..., :3, 3])
    return jnp.concatenate(
        [M.reshape(n, f, c, 9), bvec], axis=-1).reshape(-1).astype(jnp.float32)


def _diag_params(projs, rel_poses, n, f, c):
    """Hoisted params for K = diag(fx, fy, 1) and rotation shared over candidates."""
    P = projs.astype(jnp.float32)                                   # (n,C,3,3)
    T = jnp.broadcast_to(rel_poses.reshape(n, f, -1, 4, 4),
                         (n, f, c, 4, 4)).astype(jnp.float32)
    R = T[:, :, 0, :3, :3]                                          # shared rotation
    t = T[..., :3, 3]                                               # (n,f,C,3)
    fx = P[:, :, 0, 0]                                              # (n,C)
    fy = P[:, :, 1, 1]
    ratio = (fx[:, 0] / fy[:, 0])[:, None]                          # fx/fy = 1/ar

    shared = jnp.stack([
        R[..., 0, 0],
        R[..., 0, 1] * ratio,
        R[..., 1, 0] / ratio,
        R[..., 1, 1],
        R[..., 2, 0],
        R[..., 2, 1] * ratio,
        R[..., 2, 2],
        jnp.zeros_like(R[..., 0, 0]),
    ], axis=-1)                                                     # (n,f,8)

    fxb = fx[:, None, :]                                            # (n,1,C)
    fyb = fy[:, None, :]
    a_x = R[..., 0, 2:3] * fxb                                      # (n,f,C)
    b_x = fxb * t[..., 0]
    a_y = R[..., 1, 2:3] * fyb
    b_y = fyb * t[..., 1]
    g = jnp.broadcast_to(1.0 / fxb, (n, f, c))
    t2 = t[..., 2]
    cand = jnp.stack([a_x, b_x, a_y, b_y, g, t2], axis=-1)          # (n,f,C,6)

    params = jnp.concatenate([shared, cand.reshape(n, f, c * 6)], axis=-1)
    return params.reshape(-1).astype(jnp.float32)                   # (n*f*(8+6C),)


def induce_flow_dist(depths, projs, rel_poses, flow=None, compute_dist=False,
                     diagonal_proj=False, rotation_shared=False,
                     out_dtype=jnp.float32):
    """depths: (n,f,1,1,h,w), projs: (n,C,3,3), rel_poses: (n,f,C|1,4,4)."""
    n, f, _, _, h, w = depths.shape
    num_candidates = projs.shape[1]
    nf = n * f
    hw = h * w

    tr, _, rp = _row_tiling(hw)
    hwp = rp * _LANES
    needs_pad = hwp != hw

    # --- single copy of depth, flattened (+ padded only if needed) ---
    d_flat = depths.astype(jnp.float32).reshape(nf, hw)
    if needs_pad:
        d_flat = jnp.pad(d_flat, ((0, 0), (0, hwp - hw)), constant_values=1.0)
    d_tiles = d_flat.reshape(nf, rp, _LANES)

    # --- pixel-centered normalized grid in [-1, 1], same flattened layout ---
    xs = (jnp.arange(w, dtype=jnp.float32) + 0.5) / w * 2.0 - 1.0
    ys = (jnp.arange(h, dtype=jnp.float32) + 0.5) / h * 2.0 - 1.0
    xx, yy = jnp.meshgrid(xs, ys, indexing="xy")
    xy = jnp.stack([xx, yy], 0).reshape(2, hw)
    if needs_pad:
        xy = jnp.pad(xy, ((0, 0), (0, hwp - hw)))
    xy_tiles = xy.reshape(2, rp, _LANES)

    # --- choose fast (diagonal-K, shared-rotation) or generic fused path ---
    cp = rel_poses.reshape(n, f, -1, 4, 4).shape[2]
    use_diag = diagonal_proj and (rotation_shared or cp == 1)
    if use_diag:
        params = _diag_params(projs, rel_poses, n, f, num_candidates)
        kernel = functools.partial(_induce_flow_kernel_diag,
                                   num_candidates=num_candidates,
                                   out_dtype=out_dtype)
    else:
        params = _generic_params(projs, rel_poses, n, f, num_candidates)
        kernel = functools.partial(_induce_flow_kernel_generic,
                                   num_candidates=num_candidates,
                                   out_dtype=out_dtype)

    flow_tiles = induced_flow_pallas(kernel, params, xy_tiles, d_tiles,
                                     num_candidates, tr, out_dtype)
    flat = flow_tiles.reshape(nf, num_candidates, 2, hwp)
    if needs_pad:
        # TODO(synk): for non-aligned resolutions this slice is a second HBM
        # pass over the flow tensor; keep hw a multiple of 128*8 when possible.
        flat = flat[..., :hw]
    induced_flow = flat.reshape(n, f, num_candidates, 2, h, w)

    if compute_dist:
        # TODO(synk): compute_dist=True path (F.grid_sample based 3D distance)
        # is never taken by AnyCamWrapper.forward, so it is not implemented.
        raise NotImplementedError
    # Matches the torch compute_dist=False branch: dist is the u-channel copy.
    dist = induced_flow[:, :, :, :1]
    return induced_flow, dist


# pure-JAX reference for the kernel (unfused, used only for a correctness check)
def _induce_flow_reference(depths, projs, rel_poses):
    n, f, _, c, h, w = depths.shape
    nc = projs.shape[1]
    d = jnp.broadcast_to(depths.reshape(n, f, 1, 1, h, w),
                         (n, f, nc, 1, h, w)).reshape(-1, h * w)
    P = jnp.broadcast_to(projs.reshape(n, 1, nc, 3, 3),
                         (n, f, nc, 3, 3)).reshape(-1, 3, 3)
    T = jnp.broadcast_to(rel_poses.reshape(n, f, -1, 4, 4),
                         (n, f, nc, 4, 4)).reshape(-1, 4, 4)
    xg = (jnp.arange(w, dtype=jnp.float32) + 0.5) / w * 2 - 1
    yg = (jnp.arange(h, dtype=jnp.float32) + 0.5) / h * 2 - 1
    xx, yy = jnp.meshgrid(xg, yg, indexing="xy")
    xyz = jnp.stack([xx, yy, jnp.ones_like(xx)], 0).reshape(3, h * w)
    invP = jnp.linalg.inv(P)
    pts = jnp.einsum("bij,jk->bik", invP, xyz) * d[:, None, :]
    pts4 = jnp.concatenate([pts, jnp.ones_like(pts[:, :1])], 1)
    pts4 = jnp.einsum("bij,bjk->bik", T, pts4)
    pp = jnp.einsum("bij,bjk->bik", P, pts4[:, :3])
    z = jnp.maximum(pp[:, 2:3], 0.01)
    pp = jnp.clip(pp / z, -2.0, 2.0)
    fl = pp[:, :2] - xyz[None, :2]
    return fl.reshape(n, f, nc, 2, h, w)


# ---------------------------------------------------------------------------
# Deterministic synthetic stand-ins for the external sub-networks
# ---------------------------------------------------------------------------
def _skew(r):
    rx, ry, rz = r[..., 0], r[..., 1], r[..., 2]
    z = jnp.zeros_like(rx)
    return jnp.stack([jnp.stack([z, -rz, ry], -1),
                      jnp.stack([rz, z, -rx], -1),
                      jnp.stack([-ry, rx, z], -1)], -2)


class SyntheticPosePredictor:
    # TODO(synk): the real pose_predictor is an external network created by
    # make_pose_predictor(config); this stand-in is a deterministic linear head.
    rotation_shared_across_candidates = True  # enables the diag-K fast path

    def __init__(self, key, num_candidates=4):
        k1, k2 = jax.random.split(key, 2)
        self.num_candidates = num_candidates
        self.w_pose = 0.5 * jax.random.normal(k1, (6, 6), jnp.float32)
        self.w_prob = jax.random.normal(k2, (6, num_candidates), jnp.float32)
        self.focal_candidates = jnp.array([0.5, 1.0, 1.5, 2.0],
                                          jnp.float32)[:num_candidates]

    def __call__(self, images, flow_occs, depths):
        n, f = images.shape[:2]
        nc = self.num_candidates
        feats = jnp.concatenate([
            flow_occs.mean(axis=(-2, -1)),                    # (n, f, 3)
            depths.mean(axis=(-2, -1)),                       # (n, f, 1)
            images.mean(axis=(2, 3, 4))[..., None],           # (n, f, 1)
            images.std(axis=(2, 3, 4))[..., None],            # (n, f, 1)
        ], axis=-1)                                           # (n, f, 6)

        pose_vec = jnp.tanh(feats @ self.w_pose) * 0.1        # (n, f, 6)
        t, r = pose_vec[..., :3], pose_vec[..., 3:]
        R = jnp.broadcast_to(jnp.eye(3, dtype=jnp.float32), (n, f, 3, 3)) + _skew(r)
        Rb = jnp.broadcast_to(R[:, :, None], (n, f, nc, 3, 3))
        tb = t[:, :, None, :] / self.focal_candidates[None, None, :, None]
        top = jnp.concatenate([Rb, tb[..., None]], axis=-1)   # (n, f, nc, 3, 4)
        bottom = jnp.broadcast_to(jnp.array([0., 0., 0., 1.], jnp.float32),
                                  (n, f, nc, 1, 4))
        poses = jnp.concatenate([top, bottom], axis=-2)       # (n, f, nc, 4, 4)

        probs = jax.nn.softmax(feats @ self.w_prob, axis=-1)  # (n, f, nc)
        focal_length = jnp.sum(probs[:, 0] * self.focal_candidates[None], -1)
        return {
            "uncert": 0.5 + 0.1 * flow_occs[:, :, 2:3],       # (n, f, 1, h, w)
            "poses": poses,
            "focal_length": focal_length,
            "focal_length_candidates": jnp.broadcast_to(self.focal_candidates,
                                                        (n, nc)),
            "focal_length_probs": probs,
            "scaling_feature": feats,
        }


def flow_occlusion_image_processor(images_m11, data):
    # TODO(synk): real processor runs an optical-flow network (unimatch);
    # with use_provided_flow=True it concatenates provided flow + occlusions.
    ip_fwd = jnp.concatenate([images_m11, data["flows_fwd"], data["occs_fwd"]], axis=2)
    ip_bwd = jnp.concatenate([images_m11, data["flows_bwd"], data["occs_bwd"]], axis=2)
    return ip_fwd, ip_bwd


# ---------------------------------------------------------------------------
# AnyCamWrapper forward (JAX)
# ---------------------------------------------------------------------------
class AnyCamWrapperJAX:
    def __init__(self, config, key):
        self.use_provided_depth = config.get("use_provided_depth", False)
        self.use_provided_flow = config.get("use_provided_flow", False)
        self.use_provided_proj = config.get("use_provided_proj", False)
        self.try_focal_length_candidates = config.get("try_focal_length_candidates", True)
        self.train_directions = config.get("train_directions", "forward")
        self.single_focal_warmup_iters = config.get("single_focal_warmup_iters", 0)
        self.z_near = config.get("z_near", 0.1)
        self.z_far = config.get("z_far", 10)
        # bf16 flow output ~halves HBM store traffic (v5e is store-bound);
        # default f32 matches the torch module's numerics.
        self.induced_flow_dtype = config.get("induced_flow_dtype", jnp.float32)
        # TODO(synk): depth_predictor / depth_aligner are external networks; we
        # run with use_provided_depth=True so they are not exercised.
        self.pose_predictor = SyntheticPosePredictor(
            key, config.get("num_focal_candidates", 4))
        self.training = False

    def forward(self, data):
        data = dict(data)
        images = data["imgs"]
        gt_projs = data["projs"]
        n, f, c, h, w = images.shape
        gt_projs = normalize_proj(gt_projs[:, 0], h, w)

        assert self.use_provided_depth
        depths = data["depths"]                               # (n, f, 1, h, w)
        data["pred_depths"] = depths * 0.1
        data["pred_depths_list"] = [depths]

        images_ip_fwd, images_ip_bwd = flow_occlusion_image_processor(
            images * 2 - 1, data=data)
        flow_occ_fwd = images_ip_fwd[:, :, 3:6]
        flow_occ_bwd = images_ip_bwd[:, :, 3:6]
        img_features = jnp.zeros_like(images)

        if self.train_directions == "forward":
            directions = ["forward"]
        elif self.train_directions == "backward":
            directions = ["backward"]
        elif self.train_directions == "both":
            directions = ["forward", "backward"]
        else:
            raise ValueError("Invalid direction selection.")

        images_in, img_features_in, flow_occs_in, depths_in = [], [], [], []
        for direction in directions:
            if direction == "forward":
                images_in.append(images)
                img_features_in.append(img_features)
                flow_occs_in.append(flow_occ_fwd)
                depths_in.append(depths)
            else:
                images_in.append(jnp.flip(images, axis=1))
                img_features_in.append(jnp.flip(img_features, axis=1))
                flow_occs_in.append(jnp.flip(flow_occ_bwd, axis=1))
                depths_in.append(jnp.flip(depths, axis=1))
        images_in = jnp.concatenate(images_in, axis=0)
        img_features_in = jnp.concatenate(img_features_in, axis=0)
        flow_occs_in = jnp.concatenate(flow_occs_in, axis=0)
        depths_in = jnp.concatenate(depths_in, axis=0)
        n = images_in.shape[0]

        pose_result = self.pose_predictor(images_in, flow_occs_in, depths_in)
        uncert = pose_result["uncert"]
        poses = pose_result["poses"]
        focal_length = pose_result["focal_length"]
        focal_length_candidates = pose_result["focal_length_candidates"]
        focal_length_probs = pose_result["focal_length_probs"]

        if self.try_focal_length_candidates:
            proj_candidates = make_proj_from_focal_length(focal_length_candidates, w / h)
        else:
            proj_candidates = make_proj_from_focal_length(focal_length[..., None], w / h)
        if self.use_provided_proj:
            proj_candidates = gt_projs[:, None]

        aligned_depths = depths_in.reshape(-1, f, 1, 1, h, w)
        alignment_params = jnp.zeros((aligned_depths.shape[0], f, 1, 1), jnp.float32)

        induced_flow, dist = induce_flow_dist(
            aligned_depths, proj_candidates, poses, flow_occs_in[..., :2, :, :],
            diagonal_proj=not self.use_provided_proj,
            rotation_shared=getattr(self.pose_predictor,
                                    "rotation_shared_across_candidates", False),
            out_dtype=self.induced_flow_dtype)

        pose_result["flow_occs_in"] = flow_occs_in
        pose_result["aligned_depths"] = aligned_depths
        pose_result["alignment_params"] = alignment_params
        pose_result["induced_flow"] = induced_flow
        pose_result["dist"] = dist
        pose_result["proj_candidates"] = proj_candidates
        data["pose_result"] = pose_result

        if self.use_provided_proj:
            best_focal_length_index = jnp.zeros((n,), jnp.int32)
        else:
            best_focal_length_index = jnp.argmax(focal_length_probs[:, 0], axis=-1)

        ar = jnp.arange(n)
        selected_induced_flow = induced_flow[ar, :, best_focal_length_index]
        selected_proj = proj_candidates[ar, best_focal_length_index][:, None]
        if poses.ndim == 4:
            selected_poses = poses
        elif poses.shape[2] == 1:
            selected_poses = poses[:, :, 0]
        else:
            selected_poses = poses[ar, :, best_focal_length_index]
        if aligned_depths.shape[2] == 1:
            selected_aligned_depths = aligned_depths[:, :, 0]
        else:
            selected_aligned_depths = aligned_depths[ar, :, best_focal_length_index]
        if uncert.shape[2] == 1:
            selected_uncert = uncert[:, :, 0]
        else:
            selected_uncert = uncert[ar, :, best_focal_length_index]

        data["images_ip"] = images_ip_fwd
        data["induced_flow"] = selected_induced_flow
        data["induced_flow_list"] = [selected_induced_flow]
        data["valid"] = images_ip_fwd[:, :, 5:6] > 0.5
        data["proc_poses"] = selected_poses
        data["proc_projs"] = selected_proj
        data["uncertainties"] = selected_uncert
        data["weights_proc"] = selected_uncert
        data["scaled_depths"] = [selected_aligned_depths]
        data["z_near"] = jnp.asarray(self.z_near, jnp.float32)
        data["z_far"] = jnp.asarray(self.z_far, jnp.float32)
        return data


def _make_data(key, n, f, c, h, w, off_center=False):
    k_img, k_depth, k_ffwd, k_fbwd, k_ofwd, k_obwd = jax.random.split(key, 6)
    if off_center:
        K = jnp.array([[0.8 * w, 0.0, 0.55 * w],
                       [0.0, 0.9 * h, 0.45 * h],
                       [0.0, 0.0, 1.0]], jnp.float32)
    else:
        K = jnp.array([[0.8 * w, 0.0, w / 2],
                       [0.0, 0.8 * w, h / 2],
                       [0.0, 0.0, 1.0]], jnp.float32)
    return {
        "imgs": jax.random.uniform(k_img, (n, f, c, h, w), jnp.float32),
        "projs": jnp.broadcast_to(K, (n, f, 3, 3)),
        "depths": 0.5 + 2.5 * jax.random.uniform(k_depth, (n, f, 1, h, w), jnp.float32),
        "flows_fwd": 0.05 * jax.random.normal(k_ffwd, (n, f, 2, h, w), jnp.float32),
        "flows_bwd": 0.05 * jax.random.normal(k_fbwd, (n, f, 2, h, w), jnp.float32),
        "occs_fwd": jax.random.uniform(k_ofwd, (n, f, 1, h, w), jnp.float32),
        "occs_bwd": jax.random.uniform(k_obwd, (n, f, 1, h, w), jnp.float32),
    }


def _check(out, tag):
    ref_flow = _induce_flow_reference(out["pose_result"]["aligned_depths"],
                                      out["pose_result"]["proj_candidates"],
                                      out["pose_result"]["poses"])
    got_flow = out["pose_result"]["induced_flow"].astype(jnp.float32)
    assert got_flow.shape == ref_flow.shape, (tag, got_flow.shape, ref_flow.shape)
    assert bool(jnp.allclose(got_flow, ref_flow, atol=2e-4, rtol=2e-4)), \
        f"Pallas induced-flow kernel mismatch vs reference ({tag})"


if __name__ == "__main__":
    key = jax.random.PRNGKey(0)
    k_data_a, k_data_b, k_mod_a, k_mod_b = jax.random.split(key, 4)

    # --- Config A: diagonal-K fast path, lane/sublane-aligned (zero-copy) ---
    n, f, c, h, w = 2, 4, 3, 32, 32
    data_a = _make_data(k_data_a, n, f, c, h, w)
    config_a = {
        "use_provided_depth": True,
        "use_provided_flow": True,
        "use_provided_proj": False,
        "try_focal_length_candidates": True,
        "train_directions": "forward",
        "num_focal_candidates": 4,
        "z_near": 0.1,
        "z_far": 10,
    }
    model_a = AnyCamWrapperJAX(config_a, k_mod_a)
    out_a = model_a.forward(data_a)
    jax.block_until_ready(out_a["induced_flow"])
    jax.block_until_ready(out_a["pose_result"]["dist"])
    _check(out_a, "diag-K fast path")

    # --- Config B: generic fused path (provided proj w/ principal point), padded ---
    hb, wb = 24, 20
    data_b = _make_data(k_data_b, n, f, c, hb, wb, off_center=True)
    config_b = dict(config_a)
    config_b["use_provided_proj"] = True
    config_b["num_focal_candidates"] = 1
    model_b = AnyCamWrapperJAX(config_b, k_mod_b)
    out_b = model_b.forward(data_b)
    jax.block_until_ready(out_b["induced_flow"])
    _check(out_b, "generic fused path")

    print("KERNEL_OK")
</pallas_src>

<mosaic_0001>
module attributes {stable_mosaic.version = 11 : i64} {
  func.func @_induce_flow_kernel_diag(%arg0: i32, %arg1: i32, %arg2: memref<256xf32, #tpu.memory_space<smem>>, %arg3: memref<2x8x128xf32, #tpu.memory_space<vmem>>, %arg4: memref<1x8x128xf32, #tpu.memory_space<vmem>>, %arg5: memref<1x4x2x8x128xf32, #tpu.memory_space<vmem>>) attributes {dimension_semantics = [#tpu.dimension_semantics<parallel>, #tpu.dimension_semantics<parallel>], iteration_bounds = array<i64: 1, 8>, scalar_prefetch = 0 : i64, scratch_operands = 0 : i64, tpu.core_type = #tpu.core_type<tc>, window_params = [{transform_indices = @transform_0, window_bounds = array<i64: 256>}, {transform_indices = @transform_1, window_bounds = array<i64: 2, 8, 128>}, {transform_indices = @transform_2, window_bounds = array<i64: 1, 8, 128>}, {transform_indices = @transform_3, window_bounds = array<i64: 1, 4, 2, 8, 128>}]} {
    %c0 = arith.constant 0 : index
    %c0_0 = arith.constant 0 : index
    %c0_1 = arith.constant 0 : index
    %0 = vector.load %arg3[%c0, %c0_0, %c0_1] : memref<2x8x128xf32, #tpu.memory_space<vmem>>, vector<1x8x128xf32>
    %1 = vector.shape_cast %0 : vector<1x8x128xf32> to vector<8x128xf32>
    %c1 = arith.constant 1 : index
    %c0_2 = arith.constant 0 : index
    %c0_3 = arith.constant 0 : index
    %2 = vector.load %arg3[%c1, %c0_2, %c0_3] : memref<2x8x128xf32, #tpu.memory_space<vmem>>, vector<1x8x128xf32>
    %3 = vector.shape_cast %2 : vector<1x8x128xf32> to vector<8x128xf32>
    %c0_4 = arith.constant 0 : index
    %c0_5 = arith.constant 0 : index
    %c0_6 = arith.constant 0 : index
    %4 = vector.load %arg4[%c0_4, %c0_5, %c0_6] : memref<1x8x128xf32, #tpu.memory_space<vmem>>, vector<1x8x128xf32>
    %5 = vector.shape_cast %4 : vector<1x8x128xf32> to vector<8x128xf32>
    %c32_i32 = arith.constant 32 : i32
    %6 = arith.muli %arg1, %c32_i32 : i32
    %c0_i32 = arith.constant 0 : i32
    %7 = arith.addi %6, %c0_i32 : i32
    %8 = arith.index_cast %7 : i32 to index
    %9 = memref.load %arg2[%8] : memref<256xf32, #tpu.memory_space<smem>>
    %c1_i32 = arith.constant 1 : i32
    %10 = arith.addi %6, %c1_i32 : i32
    %11 = arith.index_cast %10 : i32 to index
    %12 = memref.load %arg2[%11] : memref<256xf32, #tpu.memory_space<smem>>
    %c2_i32 = arith.constant 2 : i32
    %13 = arith.addi %6, %c2_i32 : i32
    %14 = arith.index_cast %13 : i32 to index
    %15 = memref.load %arg2[%14] : memref<256xf32, #tpu.memory_space<smem>>
    %c3_i32 = arith.constant 3 : i32
    %16 = arith.addi %6, %c3_i32 : i32
    %17 = arith.index_cast %16 : i32 to index
    %18 = memref.load %arg2[%17] : memref<256xf32, #tpu.memory_space<smem>>
    %c4_i32 = arith.constant 4 : i32
    %19 = arith.addi %6, %c4_i32 : i32
    %20 = arith.index_cast %19 : i32 to index
    %21 = memref.load %arg2[%20] : memref<256xf32, #tpu.memory_space<smem>>
    %c5_i32 = arith.constant 5 : i32
    %22 = arith.addi %6, %c5_i32 : i32
    %23 = arith.index_cast %22 : i32 to index
    %24 = memref.load %arg2[%23] : memref<256xf32, #tpu.memory_space<smem>>
    %c6_i32 = arith.constant 6 : i32
    %25 = arith.addi %6, %c6_i32 : i32
    %26 = arith.index_cast %25 : i32 to index
    %27 = memref.load %arg2[%26] : memref<256xf32, #tpu.memory_space<smem>>
    %28 = arith.mulf %1, %5 : vector<8x128xf32>
    %29 = arith.mulf %3, %5 : vector<8x128xf32>
    %30 = vector.broadcast %9 : f32 to vector<8x128xf32>
    %31 = arith.mulf %30, %28 : vector<8x128xf32>
    %32 = vector.broadcast %12 : f32 to vector<8x128xf32>
    %33 = arith.mulf %32, %29 : vector<8x128xf32>
    %34 = arith.addf %31, %33 : vector<8x128xf32>
    %35 = vector.broadcast %15 : f32 to vector<8x128xf32>
    %36 = arith.mulf %35, %28 : vector<8x128xf32>
    %37 = vector.broadcast %18 : f32 to vector<8x128xf32>
    %38 = arith.mulf %37, %29 : vector<8x128xf32>
    %39 = arith.addf %36, %38 : vector<8x128xf32>
    %40 = vector.broadcast %21 : f32 to vector<8x128xf32>
    %41 = arith.mulf %40, %28 : vector<8x128xf32>
    %42 = vector.broadcast %24 : f32 to vector<8x128xf32>
    %43 = arith.mulf %42, %29 : vector<8x128xf32>
    %44 = arith.addf %41, %43 : vector<8x128xf32>
    %45 = vector.broadcast %27 : f32 to vector<8x128xf32>
    %46 = arith.mulf %45, %5 : vector<8x128xf32>
    %c8_i32 = arith.constant 8 : i32
    %47 = arith.addi %6, %c8_i32 : i32
    %c0_i32_7 = arith.constant 0 : i32
    %48 = arith.addi %47, %c0_i32_7 : i32
    %c0_i32_8 = arith.constant 0 : i32
    %49 = arith.addi %48, %c0_i32_8 : i32
    %50 = arith.index_cast %49 : i32 to index
    %51 = memref.load %arg2[%50] : memref<256xf32, #tpu.memory_space<smem>>
    %c1_i32_9 = arith.constant 1 : i32
    %52 = arith.addi %48, %c1_i32_9 : i32
    %53 = arith.index_cast %52 : i32 to index
    %54 = memref.load %arg2[%53] : memref<256xf32, #tpu.memory_space<smem>>
    %c2_i32_10 = arith.constant 2 : i32
    %55 = arith.addi %48, %c2_i32_10 : i32
    %56 = arith.index_cast %55 : i32 to index
    %57 = memref.load %arg2[%56] : memref<256xf32, #tpu.memory_space<smem>>
    %c3_i32_11 = arith.constant 3 : i32
    %58 = arith.addi %48, %c3_i32_11 : i32
    %59 = arith.index_cast %58 : i32 to index
    %60 = memref.load %arg2[%59] : memref<256xf32, #tpu.memory_space<smem>>
    %c4_i32_12 = arith.constant 4 : i32
    %61 = arith.addi %48, %c4_i32_12 : i32
    %62 = arith.index_cast %61 : i32 to index
    %63 = memref.load %arg2[%62] : memref<256xf32, #tpu.memory_space<smem>>
    %c5_i32_13 = arith.constant 5 : i32
    %64 = arith.addi %48, %c5_i32_13 : i32
    %65 = arith.index_cast %64 : i32 to index
    %66 = memref.load %arg2[%65] : memref<256xf32, #tpu.memory_space<smem>>
    %67 = vector.broadcast %51 : f32 to vector<8x128xf32>
    %68 = arith.mulf %67, %5 : vector<8x128xf32>
    %69 = arith.addf %68, %34 : vector<8x128xf32>
    %70 = vector.broadcast %54 : f32 to vector<8x128xf32>
    %71 = arith.addf %69, %70 : vector<8x128xf32>
    %72 = vector.broadcast %57 : f32 to vector<8x128xf32>
    %73 = arith.mulf %72, %5 : vector<8x128xf32>
    %74 = arith.addf %73, %39 : vector<8x128xf32>
    %75 = vector.broadcast %60 : f32 to vector<8x128xf32>
    %76 = arith.addf %74, %75 : vector<8x128xf32>
    %77 = vector.broadcast %63 : f32 to vector<8x128xf32>
    %78 = arith.mulf %77, %44 : vector<8x128xf32>
    %79 = arith.addf %78, %46 : vector<8x128xf32>
    %80 = vector.broadcast %66 : f32 to vector<8x128xf32>
    %81 = arith.addf %79, %80 : vector<8x128xf32>
    %cst = arith.constant 0.00999999977 : f32
    %82 = vector.broadcast %cst : f32 to vector<8x128xf32>
    %83 = arith.maximumf %81, %82 : vector<8x128xf32>
    %84 = tpu.reciprocal %83 {approx = true} : vector<8x128xf32> -> vector<8x128xf32>
    %85 = arith.mulf %83, %84 : vector<8x128xf32>
    %cst_14 = arith.constant 2.000000e+00 : f32
    %86 = vector.broadcast %cst_14 : f32 to vector<8x128xf32>
    %87 = arith.subf %86, %85 : vector<8x128xf32>
    %88 = arith.mulf %84, %87 : vector<8x128xf32>
    %89 = arith.mulf %71, %88 : vector<8x128xf32>
    %cst_15 = arith.constant -2.000000e+00 : f32
    %cst_16 = arith.constant 2.000000e+00 : f32
    %90 = vector.broadcast %cst_15 : f32 to vector<8x128xf32>
    %91 = arith.maximumf %90, %89 : vector<8x128xf32>
    %92 = vector.broadcast %cst_16 : f32 to vector<8x128xf32>
    %93 = arith.minimumf %92, %91 : vector<8x128xf32>
    %94 = arith.mulf %76, %88 : vector<8x128xf32>
    %cst_17 = arith.constant -2.000000e+00 : f32
    %cst_18 = arith.constant 2.000000e+00 : f32
    %95 = vector.broadcast %cst_17 : f32 to vector<8x128xf32>
    %96 = arith.maximumf %95, %94 : vector<8x128xf32>
    %97 = vector.broadcast %cst_18 : f32 to vector<8x128xf32>
    %98 = arith.minimumf %97, %96 : vector<8x128xf32>
    %99 = arith.subf %93, %1 : vector<8x128xf32>
    %c0_19 = arith.constant 0 : index
    %c0_20 = arith.constant 0 : index
    %c0_21 = arith.constant 0 : index
    %c0_22 = arith.constant 0 : index
    %c0_23 = arith.constant 0 : index
    %100 = vector.load %arg5[%c0_19, %c0_20, %c0_21, %c0_22, %c0_23] : memref<1x4x2x8x128xf32, #tpu.memory_space<vmem>>, vector<1x1x1x8x128xf32>
    %101 = vector.shape_cast %100 : vector<1x1x1x8x128xf32> to vector<8x128xf32>
    %102 = vector.shape_cast %99 : vector<8x128xf32> to vector<1x1x1x8x128xf32>
    tpu.vector_store %arg5[%c0_19, %c0_20, %c0_21, %c0_22, %c0_23], %102 {strides = array<i32>} : memref<1x4x2x8x128xf32, #tpu.memory_space<vmem>>, vector<1x1x1x8x128xf32>,
    %103 = arith.subf %98, %3 : vector<8x128xf32>
    %c0_24 = arith.constant 0 : index
    %c0_25 = arith.constant 0 : index
    %c1_26 = arith.constant 1 : index
    %c0_27 = arith.constant 0 : index
    %c0_28 = arith.constant 0 : index
    %104 = vector.load %arg5[%c0_24, %c0_25, %c1_26, %c0_27, %c0_28] : memref<1x4x2x8x128xf32, #tpu.memory_space<vmem>>, vector<1x1x1x8x128xf32>
    %105 = vector.shape_cast %104 : vector<1x1x1x8x128xf32> to vector<8x128xf32>
    %106 = vector.shape_cast %103 : vector<8x128xf32> to vector<1x1x1x8x128xf32>
    tpu.vector_store %arg5[%c0_24, %c0_25, %c1_26, %c0_27, %c0_28], %106 {strides = array<i32>} : memref<1x4x2x8x128xf32, #tpu.memory_space<vmem>>, vector<1x1x1x8x128xf32>,
    %c8_i32_29 = arith.constant 8 : i32
    %107 = arith.addi %6, %c8_i32_29 : i32
    %c6_i32_30 = arith.constant 6 : i32
    %108 = arith.addi %107, %c6_i32_30 : i32
    %c0_i32_31 = arith.constant 0 : i32
    %109 = arith.addi %108, %c0_i32_31 : i32
    %110 = arith.index_cast %109 : i32 to index
    %111 = memref.load %arg2[%110] : memref<256xf32, #tpu.memory_space<smem>>
    %c1_i32_32 = arith.constant 1 : i32
    %112 = arith.addi %108, %c1_i32_32 : i32
    %113 = arith.index_cast %112 : i32 to index
    %114 = memref.load %arg2[%113] : memref<256xf32, #tpu.memory_space<smem>>
    %c2_i32_33 = arith.constant 2 : i32
    %115 = arith.addi %108, %c2_i32_33 : i32
    %116 = arith.index_cast %115 : i32 to index
    %117 = memref.load %arg2[%116] : memref<256xf32, #tpu.memory_space<smem>>
    %c3_i32_34 = arith.constant 3 : i32
    %118 = arith.addi %108, %c3_i32_34 : i32
    %119 = arith.index_cast %118 : i32 to index
    %120 = memref.load %arg2[%119] : memref<256xf32, #tpu.memory_space<smem>>
    %c4_i32_35 = arith.constant 4 : i32
    %121 = arith.addi %108, %c4_i32_35 : i32
    %122 = arith.index_cast %121 : i32 to index
    %123 = memref.load %arg2[%122] : memref<256xf32, #tpu.memory_space<smem>>
    %c5_i32_36 = arith.constant 5 : i32
    %124 = arith.addi %108, %c5_i32_36 : i32
    %125 = arith.index_cast %124 : i32 to index
    %126 = memref.load %arg2[%125] : memref<256xf32, #tpu.memory_space<smem>>
    %127 = vector.broadcast %111 : f32 to vector<8x128xf32>
    %128 = arith.mulf %127, %5 : vector<8x128xf32>
    %129 = arith.addf %128, %34 : vector<8x128xf32>
    %130 = vector.broadcast %114 : f32 to vector<8x128xf32>
    %131 = arith.addf %129, %130 : vector<8x128xf32>
    %132 = vector.broadcast %117 : f32 to vector<8x128xf32>
    %133 = arith.mulf %132, %5 : vector<8x128xf32>
    %134 = arith.addf %133, %39 : vector<8x128xf32>
    %135 = vector.broadcast %120 : f32 to vector<8x128xf32>
    %136 = arith.addf %134, %135 : vector<8x128xf32>
    %137 = vector.broadcast %123 : f32 to vector<8x128xf32>
    %138 = arith.mulf %137, %44 : vector<8x128xf32>
    %139 = arith.addf %138, %46 : vector<8x128xf32>
    %140 = vector.broadcast %126 : f32 to vector<8x128xf32>
    %141 = arith.addf %139, %140 : vector<8x128xf32>
    %cst_37 = arith.constant 0.00999999977 : f32
    %142 = vector.broadcast %cst_37 : f32 to vector<8x128xf32>
    %143 = arith.maximumf %141, %142 : vector<8x128xf32>
    %144 = tpu.reciprocal %143 {approx = true} : vector<8x128xf32> -> vector<8x128xf32>
    %145 = arith.mulf %143, %144 : vector<8x128xf32>
    %cst_38 = arith.constant 2.000000e+00 : f32
    %146 = vector.broadcast %cst_38 : f32 to vector<8x128xf32>
    %147 = arith.subf %146, %145 : vector<8x128xf32>
    %148 = arith.mulf %144, %147 : vector<8x128xf32>
    %149 = arith.mulf %131, %148 : vector<8x128xf32>
    %cst_39 = arith.constant -2.000000e+00 : f32
    %cst_40 = arith.constant 2.000000e+00 : f32
    %150 = vector.broadcast %cst_39 : f32 to vector<8x128xf32>
    %151 = arith.maximumf %150, %149 : vector<8x128xf32>
    %152 = vector.broadcast %cst_40 : f32 to vector<8x128xf32>
    %153 = arith.minimumf %152, %151 : vector<8x128xf32>
    %154 = arith.mulf %136, %148 : vector<8x128xf32>
    %cst_41 = arith.constant -2.000000e+00 : f32
    %cst_42 = arith.constant 2.000000e+00 : f32
    %155 = vector.broadcast %cst_41 : f32 to vector<8x128xf32>
    %156 = arith.maximumf %155, %154 : vector<8x128xf32>
    %157 = vector.broadcast %cst_42 : f32 to vector<8x128xf32>
    %158 = arith.minimumf %157, %156 : vector<8x128xf32>
    %159 = arith.subf %153, %1 : vector<8x128xf32>
    %c0_43 = arith.constant 0 : index
    %c1_44 = arith.constant 1 : index
    %c0_45 = arith.constant 0 : index
    %c0_46 = arith.constant 0 : index
    %c0_47 = arith.constant 0 : index
    %160 = vector.load %arg5[%c0_43, %c1_44, %c0_45, %c0_46, %c0_47] : memref<1x4x2x8x128xf32, #tpu.memory_space<vmem>>, vector<1x1x1x8x128xf32>
    %161 = vector.shape_cast %160 : vector<1x1x1x8x128xf32> to vector<8x128xf32>
    %162 = vector.shape_cast %159 : vector<8x128xf32> to vector<1x1x1x8x128xf32>
    tpu.vector_store %arg5[%c0_43, %c1_44, %c0_45, %c0_46, %c0_47], %162 {strides = array<i32>} : memref<1x4x2x8x128xf32, #tpu.memory_space<vmem>>, vector<1x1x1x8x128xf32>,
    %163 = arith.subf %158, %3 : vector<8x128xf32>
    %c0_48 = arith.constant 0 : index
    %c1_49 = arith.constant 1 : index
    %c1_50 = arith.constant 1 : index
    %c0_51 = arith.constant 0 : index
    %c0_52 = arith.constant 0 : index
    %164 = vector.load %arg5[%c0_48, %c1_49, %c1_50, %c0_51, %c0_52] : memref<1x4x2x8x128xf32, #tpu.memory_space<vmem>>, vector<1x1x1x8x128xf32>
    %165 = vector.shape_cast %164 : vector<1x1x1x8x128xf32> to vector<8x128xf32>
    %166 = vector.shape_cast %163 : vector<8x128xf32> to vector<1x1x1x8x128xf32>
    tpu.vector_store %arg5[%c0_48, %c1_49, %c1_50, %c0_51, %c0_52], %166 {strides = array<i32>} : memref<1x4x2x8x128xf32, #tpu.memory_space<vmem>>, vector<1x1x1x8x128xf32>,
    %c8_i32_53 = arith.constant 8 : i32
    %167 = arith.addi %6, %c8_i32_53 : i32
    %c12_i32 = arith.constant 12 : i32
    %168 = arith.addi %167, %c12_i32 : i32
    %c0_i32_54 = arith.constant 0 : i32
    %169 = arith.addi %168, %c0_i32_54 : i32
    %170 = arith.index_cast %169 : i32 to index
    %171 = memref.load %arg2[%170] : memref<256xf32, #tpu.memory_space<smem>>
    %c1_i32_55 = arith.constant 1 : i32
    %172 = arith.addi %168, %c1_i32_55 : i32
    %173 = arith.index_cast %172 : i32 to index
    %174 = memref.load %arg2[%173] : memref<256xf32, #tpu.memory_space<smem>>
    %c2_i32_56 = arith.constant 2 : i32
    %175 = arith.addi %168, %c2_i32_56 : i32
    %176 = arith.index_cast %175 : i32 to index
    %177 = memref.load %arg2[%176] : memref<256xf32, #tpu.memory_space<smem>>
    %c3_i32_57 = arith.constant 3 : i32
    %178 = arith.addi %168, %c3_i32_57 : i32
    %179 = arith.index_cast %178 : i32 to index
    %180 = memref.load %arg2[%179] : memref<256xf32, #tpu.memory_space<smem>>
    %c4_i32_58 = arith.constant 4 : i32
    %181 = arith.addi %168, %c4_i32_58 : i32
    %182 = arith.index_cast %181 : i32 to index
    %183 = memref.load %arg2[%182] : memref<256xf32, #tpu.memory_space<smem>>
    %c5_i32_59 = arith.constant 5 : i32
    %184 = arith.addi %168, %c5_i32_59 : i32
    %185 = arith.index_cast %184 : i32 to index
    %186 = memref.load %arg2[%185] : memref<256xf32, #tpu.memory_space<smem>>
    %187 = vector.broadcast %171 : f32 to vector<8x128xf32>
    %188 = arith.mulf %187, %5 : vector<8x128xf32>
    %189 = arith.addf %188, %34 : vector<8x128xf32>
    %190 = vector.broadcast %174 : f32 to vector<8x128xf32>
    %191 = arith.addf %189, %190 : vector<8x128xf32>
    %192 = vector.broadcast %177 : f32 to vector<8x128xf32>
    %193 = arith.mulf %192, %5 : vector<8x128xf32>
    %194 = arith.addf %193, %39 : vector<8x128xf32>
    %195 = vector.broadcast %180 : f32 to vector<8x128xf32>
    %196 = arith.addf %194, %195 : vector<8x128xf32>
    %197 = vector.broadcast %183 : f32 to vector<8x128xf32>
    %198 = arith.mulf %197, %44 : vector<8x128xf32>
    %199 = arith.addf %198, %46 : vector<8x128xf32>
    %200 = vector.broadcast %186 : f32 to vector<8x128xf32>
    %201 = arith.addf %199, %200 : vector<8x128xf32>
    %cst_60 = arith.constant 0.00999999977 : f32
    %202 = vector.broadcast %cst_60 : f32 to vector<8x128xf32>
    %203 = arith.maximumf %201, %202 : vector<8x128xf32>
    %204 = tpu.reciprocal %203 {approx = true} : vector<8x128xf32> -> vector<8x128xf32>
    %205 = arith.mulf %203, %204 : vector<8x128xf32>
    %cst_61 = arith.constant 2.000000e+00 : f32
    %206 = vector.broadcast %cst_61 : f32 to vector<8x128xf32>
    %207 = arith.subf %206, %205 : vector<8x128xf32>
    %208 = arith.mulf %204, %207 : vector<8x128xf32>
    %209 = arith.mulf %191, %208 : vector<8x128xf32>
    %cst_62 = arith.constant -2.000000e+00 : f32
    %cst_63 = arith.constant 2.000000e+00 : f32
    %210 = vector.broadcast %cst_62 : f32 to vector<8x128xf32>
    %211 = arith.maximumf %210, %209 : vector<8x128xf32>
    %212 = vector.broadcast %cst_63 : f32 to vector<8x128xf32>
    %213 = arith.minimumf %212, %211 : vector<8x128xf32>
    %214 = arith.mulf %196, %208 : vector<8x128xf32>
    %cst_64 = arith.constant -2.000000e+00 : f32
    %cst_65 = arith.constant 2.000000e+00 : f32
    %215 = vector.broadcast %cst_64 : f32 to vector<8x128xf32>
    %216 = arith.maximumf %215, %214 : vector<8x128xf32>
    %217 = vector.broadcast %cst_65 : f32 to vector<8x128xf32>
    %218 = arith.minimumf %217, %216 : vector<8x128xf32>
    %219 = arith.subf %213, %1 : vector<8x128xf32>
    %c0_66 = arith.constant 0 : index
    %c2 = arith.constant 2 : index
    %c0_67 = arith.constant 0 : index
    %c0_68 = arith.constant 0 : index
    %c0_69 = arith.constant 0 : index
    %220 = vector.load %arg5[%c0_66, %c2, %c0_67, %c0_68, %c0_69] : memref<1x4x2x8x128xf32, #tpu.memory_space<vmem>>, vector<1x1x1x8x128xf32>
    %221 = vector.shape_cast %220 : vector<1x1x1x8x128xf32> to vector<8x128xf32>
    %222 = vector.shape_cast %219 : vector<8x128xf32> to vector<1x1x1x8x128xf32>
    tpu.vector_store %arg5[%c0_66, %c2, %c0_67, %c0_68, %c0_69], %222 {strides = array<i32>} : memref<1x4x2x8x128xf32, #tpu.memory_space<vmem>>, vector<1x1x1x8x128xf32>,
    %223 = arith.subf %218, %3 : vector<8x128xf32>
    %c0_70 = arith.constant 0 : index
    %c2_71 = arith.constant 2 : index
    %c1_72 = arith.constant 1 : index
    %c0_73 = arith.constant 0 : index
    %c0_74 = arith.constant 0 : index
    %224 = vector.load %arg5[%c0_70, %c2_71, %c1_72, %c0_73, %c0_74] : memref<1x4x2x8x128xf32, #tpu.memory_space<vmem>>, vector<1x1x1x8x128xf32>
    %225 = vector.shape_cast %224 : vector<1x1x1x8x128xf32> to vector<8x128xf32>
    %226 = vector.shape_cast %223 : vector<8x128xf32> to vector<1x1x1x8x128xf32>
    tpu.vector_store %arg5[%c0_70, %c2_71, %c1_72, %c0_73, %c0_74], %226 {strides = array<i32>} : memref<1x4x2x8x128xf32, #tpu.memory_space<vmem>>, vector<1x1x1x8x128xf32>,
    %c8_i32_75 = arith.constant 8 : i32
    %227 = arith.addi %6, %c8_i32_75 : i32
    %c18_i32 = arith.constant 18 : i32
    %228 = arith.addi %227, %c18_i32 : i32
    %c0_i32_76 = arith.constant 0 : i32
    %229 = arith.addi %228, %c0_i32_76 : i32
    %230 = arith.index_cast %229 : i32 to index
    %231 = memref.load %arg2[%230] : memref<256xf32, #tpu.memory_space<smem>>
    %c1_i32_77 = arith.constant 1 : i32
    %232 = arith.addi %228, %c1_i32_77 : i32
    %233 = arith.index_cast %232 : i32 to index
    %234 = memref.load %arg2[%233] : memref<256xf32, #tpu.memory_space<smem>>
    %c2_i32_78 = arith.constant 2 : i32
    %235 = arith.addi %228, %c2_i32_78 : i32
    %236 = arith.index_cast %235 : i32 to index
    %237 = memref.load %arg2[%236] : memref<256xf32, #tpu.memory_space<smem>>
    %c3_i32_79 = arith.constant 3 : i32
    %238 = arith.addi %228, %c3_i32_79 : i32
    %239 = arith.index_cast %238 : i32 to index
    %240 = memref.load %arg2[%239] : memref<256xf32, #tpu.memory_space<smem>>
    %c4_i32_80 = arith.constant 4 : i32
    %241 = arith.addi %228, %c4_i32_80 : i32
    %242 = arith.index_cast %241 : i32 to index
    %243 = memref.load %arg2[%242] : memref<256xf32, #tpu.memory_space<smem>>
    %c5_i32_81 = arith.constant 5 : i32
    %244 = arith.addi %228, %c5_i32_81 : i32
    %245 = arith.index_cast %244 : i32 to index
    %246 = memref.load %arg2[%245] : memref<256xf32, #tpu.memory_space<smem>>
    %247 = vector.broadcast %231 : f32 to vector<8x128xf32>
    %248 = arith.mulf %247, %5 : vector<8x128xf32>
    %249 = arith.addf %248, %34 : vector<8x128xf32>
    %250 = vector.broadcast %234 : f32 to vector<8x128xf32>
    %251 = arith.addf %249, %250 : vector<8x128xf32>
    %252 = vector.broadcast %237 : f32 to vector<8x128xf32>
    %253 = arith.mulf %252, %5 : vector<8x128xf32>
    %254 = arith.addf %253, %39 : vector<8x128xf32>
    %255 = vector.broadcast %240 : f32 to vector<8x128xf32>
    %256 = arith.addf %254, %255 : vector<8x128xf32>
    %257 = vector.broadcast %243 : f32 to vector<8x128xf32>
    %258 = arith.mulf %257, %44 : vector<8x128xf32>
    %259 = arith.addf %258, %46 : vector<8x128xf32>
    %260 = vector.broadcast %246 : f32 to vector<8x128xf32>
    %261 = arith.addf %259, %260 : vector<8x128xf32>
    %cst_82 = arith.constant 0.00999999977 : f32
    %262 = vector.broadcast %cst_82 : f32 to vector<8x128xf32>
    %263 = arith.maximumf %261, %262 : vector<8x128xf32>
    %264 = tpu.reciprocal %263 {approx = true} : vector<8x128xf32> -> vector<8x128xf32>
    %265 = arith.mulf %263, %264 : vector<8x128xf32>
    %cst_83 = arith.constant 2.000000e+00 : f32
    %266 = vector.broadcast %cst_83 : f32 to vector<8x128xf32>
    %267 = arith.subf %266, %265 : vector<8x128xf32>
    %268 = arith.mulf %264, %267 : vector<8x128xf32>
    %269 = arith.mulf %251, %268 : vector<8x128xf32>
    %cst_84 = arith.constant -2.000000e+00 : f32
    %cst_85 = arith.constant 2.000000e+00 : f32
    %270 = vector.broadcast %cst_84 : f32 to vector<8x128xf32>
    %271 = arith.maximumf %270, %269 : vector<8x128xf32>
    %272 = vector.broadcast %cst_85 : f32 to vector<8x128xf32>
    %273 = arith.minimumf %272, %271 : vector<8x128xf32>
    %274 = arith.mulf %256, %268 : vector<8x128xf32>
    %cst_86 = arith.constant -2.000000e+00 : f32
    %cst_87 = arith.constant 2.000000e+00 : f32
    %275 = vector.broadcast %cst_86 : f32 to vector<8x128xf32>
    %276 = arith.maximumf %275, %274 : vector<8x128xf32>
    %277 = vector.broadcast %cst_87 : f32 to vector<8x128xf32>
    %278 = arith.minimumf %277, %276 : vector<8x128xf32>
    %279 = arith.subf %273, %1 : vector<8x128xf32>
    %c0_88 = arith.constant 0 : index
    %c3 = arith.constant 3 : index
    %c0_89 = arith.constant 0 : index
    %c0_90 = arith.constant 0 : index
    %c0_91 = arith.constant 0 : index
    %280 = vector.load %arg5[%c0_88, %c3, %c0_89, %c0_90, %c0_91] : memref<1x4x2x8x128xf32, #tpu.memory_space<vmem>>, vector<1x1x1x8x128xf32>
    %281 = vector.shape_cast %280 : vector<1x1x1x8x128xf32> to vector<8x128xf32>
    %282 = vector.shape_cast %279 : vector<8x128xf32> to vector<1x1x1x8x128xf32>
    tpu.vector_store %arg5[%c0_88, %c3, %c0_89, %c0_90, %c0_91], %282 {strides = array<i32>} : memref<1x4x2x8x128xf32, #tpu.memory_space<vmem>>, vector<1x1x1x8x128xf32>,
    %283 = arith.subf %278, %3 : vector<8x128xf32>
    %c0_92 = arith.constant 0 : index
    %c3_93 = arith.constant 3 : index
    %c1_94 = arith.constant 1 : index
    %c0_95 = arith.constant 0 : index
    %c0_96 = arith.constant 0 : index
    %284 = vector.load %arg5[%c0_92, %c3_93, %c1_94, %c0_95, %c0_96] : memref<1x4x2x8x128xf32, #tpu.memory_space<vmem>>, vector<1x1x1x8x128xf32>
    %285 = vector.shape_cast %284 : vector<1x1x1x8x128xf32> to vector<8x128xf32>
    %286 = vector.shape_cast %283 : vector<8x128xf32> to vector<1x1x1x8x128xf32>
    tpu.vector_store %arg5[%c0_92, %c3_93, %c1_94, %c0_95, %c0_96], %286 {strides = array<i32>} : memref<1x4x2x8x128xf32, #tpu.memory_space<vmem>>, vector<1x1x1x8x128xf32>,
    return
  }
  func.func @transform_0(%arg0: i32, %arg1: i32) -> i32 {
    %c0_i32 = arith.constant 0 : i32
    %c0_i32_0 = arith.constant 0 : i32
    return %c0_i32 : i32
  }
  func.func @transform_1(%arg0: i32, %arg1: i32) -> (i32, i32, i32) {
    %c0_i32 = arith.constant 0 : i32
    %c0_i32_0 = arith.constant 0 : i32
    %c0_i32_1 = arith.constant 0 : i32
    return %c0_i32, %arg0, %c0_i32_0 : i32, i32, i32
  }
  func.func @transform_2(%arg0: i32, %arg1: i32) -> (i32, i32, i32) {
    %c0_i32 = arith.constant 0 : i32
    %c0_i32_0 = arith.constant 0 : i32
    return %arg1, %arg0, %c0_i32 : i32, i32, i32
  }
  func.func @transform_3(%arg0: i32, %arg1: i32) -> (i32, i32, i32, i32, i32) {
    %c0_i32 = arith.constant 0 : i32
    %c0_i32_0 = arith.constant 0 : i32
    %c0_i32_1 = arith.constant 0 : i32
    %c0_i32_2 = arith.constant 0 : i32
    return %arg1, %c0_i32, %c0_i32_0, %arg0, %c0_i32_1 : i32, i32, i32, i32, i32
  }
}

</mosaic_0001>

<llo_original>
// kernel: tpu_custom_call.1
$region0: #{tpu_custom_call.1}
  #allocation0 [shape = 'u32[]', space=smem, size = 0x4, offset = 0x4, fixed_abs, tag = 'smem constant byte address 0x4 - core index']
  #allocation1 [shape = 'u32[144,128]{1,0:T(1,128)}', space=vmem, size = 0x12000, scoped, tag = 'internal scratch']
  %s0 = inlined_call_operand.hbm [shape: f32[256], index: 0, kind: input, shape index: {}]
  %s1 = inlined_call_operand.hbm [shape: f32[2,8,128], index: 1, kind: input, shape index: {}]
  %s2 = inlined_call_operand.hbm [shape: f32[8,8,128], index: 2, kind: input, shape index: {}]
  %s3 = inlined_call_operand.hbm [shape: f32[8,4,2,8,128], index: 3, kind: output, shape index: {}]
  %s4 = sld [smem:[#allocation0]]
  $region57: #{tpu_custom_call.1} parent=0
    _
  %s6 = ssub.s32 1, %s4
  %s7 = scalar_select 0, %s6, %s4
  $region1: #{tpu_custom_call.1} parent=0
    #allocation2 [shape = 'u8[1024]{0}', space=smem, size = 0x400, scoped, tag = 'input window, operand 0, single buffered']
    #allocation3 [shape = 's32[2]{0}', space=sflag, size = 0x8, scoped, tag = 'scoped memory for tpu_custom_call.1']
    #allocation4 [shape = 's32[2]{0}', space=sflag, size = 0x8, scoped, tag = 'scoped memory for tpu_custom_call.1']
    #allocation5 [shape = 's32[2]{0}', space=sflag, size = 0x8, scoped, tag = 'scoped memory for tpu_custom_call.1']
    #allocation6 [shape = 'u8[8192]{0}', space=vmem, size = 0x2000, scoped, tag = 'input window, operand 1, single buffered']
    #allocation7 [shape = 'u8[8192]{0}', space=vmem, size = 0x2000, scoped, tag = 'input window, operand 2']
    #allocation8 [shape = 's32[2]{0}', space=sflag, size = 0x8, scoped, tag = 'scoped memory for tpu_custom_call.1']
    #allocation9 [shape = 'u8[65536]{0}', space=vmem, size = 0x10000, scoped, tag = 'output window, operand 0']
    %8 = vsyncpa [#allocation5], 0
    %9 = vsyncpa [#allocation3], 0
    %10 = vsyncpa [#allocation8], 0
    %s11 = scalar_lea.sflag [#allocation8], 1
    %12 = vsyncpa %s11, 0
    %13 = vsyncpa [#allocation4], 0
    %s14 = scalar_lea.sflag [#allocation4], 1
    %15 = vsyncpa %s14, 0
    loop: start=0, step=1, limit=10
    $region2: #{tpu_custom_call.1} parent=1 // loop_pre_header
      _
    $region3: #{tpu_custom_call.1} parent=1 // loop_header
      %s17 = sphi 0, %s21
      %p18 = scmp.ge.s32.totalorder %s17, 10
      %s24 = sphi 0, %s36
      %s25 = sphi 0, %s32
      %s26 = sphi 0, %s24
      %s27 = sphi 0, %s25
      %s28 = sphi 0, %s26
      %s29 = sphi 0, %s27
      %s37 = sphi 0, %s37
      %s39 = sphi 0, %s37
      %s40 = sphi 0, %s39
      %s54 = sphi 0, %s40
      %s60 = sphi 0, %s62
      %s63 = sphi 0, %s60
      %s64 = sphi 0, %s63
      %s80 = sphi 0, %s64
      %s88 = sphi 0, %s90
      %s91 = sphi 0, %s88
      %s92 = sphi 0, %s91
      %s108 = sphi 0, %s92
      %s116 = sphi 0, %s118
      %s119 = sphi 0, %s116
      %s120 = sphi 0, %s119
      %s136 = sphi 0, %s120
    $region4: #{tpu_custom_call.1} parent=1 // loop_header_branch
      %20 = sbr.rel (%p18) target = $region8
    $region5: #{tpu_custom_call.1} parent=1 // loop_body
      %s22 = ssub.s32 %s17, 1
      %s23 = ssub.s32 %s17, 2
      %s30 = sadd.s32 1, %s25
      %p31 = scmp.ge.s32.totalorder %s30, 8
      %s32 = scalar_select %p31, 0, %s30
      %s33 = sadd.s32 1, %s24
      %s34 = scalar_select %p31, %s33, %s24
      %p35 = scmp.ge.s32.totalorder %s34, 1
      %s36 = scalar_select %p35, 0, %s34
      %s38 = sadd.s32 %s37, 1
      %p41 = scmp.eq.s32.totalorder %s17, 7
      %p42 = scmp.ne.s32.totalorder %s37, %s39
      %p43 = scmp.eq.s32.totalorder %s17, 0
      %p44 = por %p42, %p43
      %p45 = scmp.ne.s32.totalorder %s37, %s39
      %p46 = scmp.eq.s32.totalorder %s22, 7
      %p47 = por %p45, %p46
      %p48 = scmp.ne.s32.totalorder %s39, %s40
      %p49 = scmp.eq.s32.totalorder %s22, 0
      %p50 = por %p48, %p49
      %p51 = scmp.ne.s32.totalorder %s39, %s40
      %p52 = scmp.eq.s32.totalorder %s23, 7
      %p53 = por %p51, %p52
      %p55 = scmp.ne.s32.totalorder %s40, %s54
      %p56 = scmp.eq.s32.totalorder %s23, 0
      %p57 = por %p55, %p56
      %s58 = ssub.s32 %s24, %s36
      %p59 = scmp.eq.s32.totalorder %s58, 0
      %s61 = sadd.s32 %s60, 1
      %s62 = scalar_select %p59, %s60, %s61
      %p65 = pneg %p59
      %p66 = scmp.eq.s32.totalorder %s17, 7
      %p67 = por %p65, %p66
      %p68 = scmp.ne.s32.totalorder %s60, %s63
      %p69 = scmp.eq.s32.totalorder %s17, 0
      %p70 = por %p68, %p69
      %p71 = scmp.ne.s32.totalorder %s60, %s63
      %p72 = scmp.eq.s32.totalorder %s22, 7
      %p73 = por %p71, %p72
      %p74 = scmp.ne.s32.totalorder %s63, %s64
      %p75 = scmp.eq.s32.totalorder %s22, 0
      %p76 = por %p74, %p75
      %p77 = scmp.ne.s32.totalorder %s63, %s64
      %p78 = scmp.eq.s32.totalorder %s23, 7
      %p79 = por %p77, %p78
      %p81 = scmp.ne.s32.totalorder %s64, %s80
      %p82 = scmp.eq.s32.totalorder %s23, 0
      %p83 = por %p81, %p82
      %s84 = ssub.s32 %s25, %s32
      %s85 = ssub.s32 %s24, %s36
      %s86 = sor.u32 %s84, %s85
      %p87 = scmp.eq.s32.totalorder %s86, 0
      %s89 = sadd.s32 %s88, 1
      %s90 = scalar_select %p87, %s88, %s89
      %p93 = pneg %p87
      %p94 = scmp.eq.s32.totalorder %s17, 7
      %p95 = por %p93, %p94
      %p96 = scmp.ne.s32.totalorder %s88, %s91
      %p97 = scmp.eq.s32.totalorder %s17, 0
      %p98 = por %p96, %p97
      %p99 = scmp.ne.s32.totalorder %s88, %s91
      %p100 = scmp.eq.s32.totalorder %s22, 7
      %p101 = por %p99, %p100
      %p102 = scmp.ne.s32.totalorder %s91, %s92
      %p103 = scmp.eq.s32.totalorder %s22, 0
      %p104 = por %p102, %p103
      %p105 = scmp.ne.s32.totalorder %s91, %s92
      %p106 = scmp.eq.s32.totalorder %s23, 7
      %p107 = por %p105, %p106
      %p109 = scmp.ne.s32.totalorder %s92, %s108
      %p110 = scmp.eq.s32.totalorder %s23, 0
      %p111 = por %p109, %p110
      %s112 = ssub.s32 %s25, %s32
      %s113 = ssub.s32 %s24, %s36
      %s114 = sor.u32 %s112, %s113
      %p115 = scmp.eq.s32.totalorder %s114, 0
      %s117 = sadd.s32 %s116, 1
      %s118 = scalar_select %p115, %s116, %s117
      %p121 = pneg %p115
      %p122 = scmp.eq.s32.totalorder %s17, 7
      %p123 = por %p121, %p122
      %p124 = scmp.ne.s32.totalorder %s116, %s119
      %p125 = scmp.eq.s32.totalorder %s17, 0
      %p126 = por %p124, %p125
      %p127 = scmp.ne.s32.totalorder %s116, %s119
      %p128 = scmp.eq.s32.totalorder %s22, 7
      %p129 = por %p127, %p128
      %p130 = scmp.ne.s32.totalorder %s119, %s120
      %p131 = scmp.eq.s32.totalorder %s22, 0
      %p132 = por %p130, %p131
      %p133 = scmp.ne.s32.totalorder %s119, %s120
      %p134 = scmp.eq.s32.totalorder %s23, 7
      %p135 = por %p133, %p134
      %p137 = scmp.ne.s32.totalorder %s120, %s136
      %p138 = scmp.eq.s32.totalorder %s23, 0
      %p139 = por %p137, %p138
      %p140 = scmp.le.s32.totalorder 1, %s17
      %p141 = scmp.lt.s32.totalorder %s17, 9
      %p142 = pnand %p140, %p141
      %p143 = pneg %p142
      // Predicated region
      $region9: #{tpu_custom_call.1} parent=5 // pred_check
        _
      $region10: #{tpu_custom_call.1} parent=5 // pred_check_branch
        %145 = sbr.rel (%p142) target = $region12
      $region11: #{tpu_custom_call.1} parent=5 // pred_region
        %s146 = ssub.s32 %s17, 1
        // Predicated region
        $region13: #{tpu_custom_call.1} parent=11 // pred_check
          %p147 = pneg %p50
        $region14: #{tpu_custom_call.1} parent=11 // pred_check_branch
          %149 = sbr.rel (%p147) target = $region16
        $region15: #{tpu_custom_call.1} parent=11 // pred_region
          %s151 = ssub.s32 32, 32
          %152 = vsyncadd [#allocation5], %s151
          %155 = dma.hbm_to_smem %s0, 32, [#allocation2], [#allocation5]
        $region16: #{tpu_custom_call.1} parent=11 // pred_fallthru
          _
        // Predicated region
        $region17: #{tpu_custom_call.1} parent=11 // pred_check
          %p156 = pneg %p76
        $region18: #{tpu_custom_call.1} parent=11 // pred_check_branch
          %158 = sbr.rel (%p156) target = $region20
        $region19: #{tpu_custom_call.1} parent=11 // pred_region
          %s160 = ssub.s32 256, 256
          %161 = vsyncadd [#allocation3], %s160
          %s162 = smul.addr %s26, 128
          %s163 = scalar_lea.hbm %s1, %s162
          %s164 = sshll.u32 [#allocation6], 4
          %s165 = int_to_ptr.vmem [resolvable:$true] %s164
          %170 = dma.hbm_to_vmem [thread:$0]  %s163, 256, %s165, [#allocation3], 128, 128, 8
        $region20: #{tpu_custom_call.1} parent=11 // pred_fallthru
          _
      $region12: #{tpu_custom_call.1} parent=5 // pred_fallthru
        _
      %p171 = scmp.lt.s32.totalorder %s17, 8
      // Predicated region
      $region21: #{tpu_custom_call.1} parent=5 // pred_check
        %p172 = pneg %p171
      $region22: #{tpu_custom_call.1} parent=5 // pred_check_branch
        %174 = sbr.rel (%p172) target = $region24
      $region23: #{tpu_custom_call.1} parent=5 // pred_region
        // Predicated region
        $region25: #{tpu_custom_call.1} parent=23 // pred_check
          %p175 = pneg %p98
        $region26: #{tpu_custom_call.1} parent=23 // pred_check_branch
          %177 = sbr.rel (%p175) target = $region28
        $region27: #{tpu_custom_call.1} parent=23 // pred_region
          %s178 = sand.u32 %s88, 1
          %s179 = scalar_lea.sflag [#allocation8], %s178
          %s180 = sand.u32 %s88, 1
          %s181 = smul.addr %s180, 8
          %s182 = scalar_lea.vmem [#allocation7], %s181
          %s184 = ssub.s32 128, 128
          %185 = vsyncadd %s179, %s184
          %s186 = sadd.s32 %s24, %s25
          %s187 = smul.addr %s186, 128
          %s188 = scalar_lea.hbm %s2, %s187
          %s190 = sshll.u32 %s182, 4
          %s191 = int_to_ptr.vmem [resolvable:$true] %s190
          %193 = dma.hbm_to_vmem [thread:$0]  %s188, 128, %s191, %s179
        $region28: #{tpu_custom_call.1} parent=23 // pred_fallthru
          _
      $region24: #{tpu_custom_call.1} parent=5 // pred_fallthru
        _
      %p194 = scmp.le.s32.totalorder 1, %s17
      %p195 = scmp.lt.s32.totalorder %s17, 9
      %p196 = pnand %p194, %p195
      %p197 = pneg %p196
      // Predicated region
      $region29: #{tpu_custom_call.1} parent=5 // pred_check
        _
      $region30: #{tpu_custom_call.1} parent=5 // pred_check_branch
        %199 = sbr.rel (%p196) target = $region32
      $region31: #{tpu_custom_call.1} parent=5 // pred_region
        %s200 = ssub.s32 %s17, 1
        // Predicated region
        $region33: #{tpu_custom_call.1} parent=31 // pred_check
          %p201 = pneg %p50
        $region34: #{tpu_custom_call.1} parent=31 // pred_check_branch
          %203 = sbr.rel (%p201) target = $region36
        $region35: #{tpu_custom_call.1} parent=31 // pred_region
          %204 = dma.done [#allocation5], 32
        $region36: #{tpu_custom_call.1} parent=31 // pred_fallthru
          _
        // Predicated region
        $region37: #{tpu_custom_call.1} parent=31 // pred_check
          %p205 = pneg %p76
        $region38: #{tpu_custom_call.1} parent=31 // pred_check_branch
          %207 = sbr.rel (%p205) target = $region40
        $region39: #{tpu_custom_call.1} parent=31 // pred_region
          %208 = dma.done [#allocation3], 256
        $region40: #{tpu_custom_call.1} parent=31 // pred_fallthru
          _
        %s209 = sand.u32 %s91, 1
        %s210 = scalar_lea.sflag [#allocation8], %s209
        %s211 = sand.u32 %s91, 1
        %s212 = smul.addr %s211, 8
        %s213 = scalar_lea.vmem [#allocation7], %s212
        // Predicated region
        $region41: #{tpu_custom_call.1} parent=31 // pred_check
          %p214 = pneg %p104
        $region42: #{tpu_custom_call.1} parent=31 // pred_check_branch
          %216 = sbr.rel (%p214) target = $region44
        $region43: #{tpu_custom_call.1} parent=31 // pred_region
          %217 = dma.done %s210, 128
        $region44: #{tpu_custom_call.1} parent=31 // pred_fallthru
          _
        %218 = sfence
        %p219 = pneg %p50
        %p220 = pneg %p47
        %p221 = pneg %p76
        %p222 = pneg %p73
        %s223 = sand.u32 %s91, 1
        %s224 = scalar_lea.sflag [#allocation8], %s223
        %s225 = sand.u32 %s91, 1
        %s226 = smul.addr %s225, 8
        %s227 = scalar_lea.vmem [#allocation7], %s226
        %p228 = pneg %p104
        %p229 = pneg %p101
        %p230 = pneg %p132
        %p231 = pneg %p129
        %s232 = sand.u32 %s119, 1
        %s233 = scalar_lea.sflag [#allocation4], %s232
        %s234 = sand.u32 %s119, 1
        %s235 = smul.addr %s234, 64
        %s236 = scalar_lea.vmem [#allocation9], %s235
        %v237 = vld [vmem:[#allocation6] sm:$0xff]
        %s238 = scalar_lea.vmem [#allocation6], 8
        %v239 = vld [vmem:[%s238] sm:$0xff]
        %v240 = vld [vmem:[%s213] sm:$0xff]
        %s241 = smul.u32 %s27, 32
        %s242 = sld [smem:[#allocation2 + %s241]]
        %s243 = sadd.s32 %s241, 1
        %s244 = sld [smem:[#allocation2 + %s243]]
        %s245 = sadd.s32 %s241, 2
        %s246 = sld [smem:[#allocation2 + %s245]]
        %s247 = sadd.s32 %s241, 3
        %s248 = sld [smem:[#allocation2 + %s247]]
        %s249 = sadd.s32 %s241, 4
        %s250 = sld [smem:[#allocation2 + %s249]]
        %s251 = sadd.s32 %s241, 5
        %s252 = sld [smem:[#allocation2 + %s251]]
        %s253 = sadd.s32 %s241, 6
        %s254 = sld [smem:[#allocation2 + %s253]]
        %v255 = vmul.f32 %v237, %v240
        %v256 = vmul.f32 %v239, %v240
        %v257 = vstv %s242
        %v258 = vmul.f32 %v257, %v255
        %v259 = vstv %s244
        %v260 = vmul.f32 %v259, %v256
        %v261 = vadd.f32 %v258, %v260
        %v262 = vstv %s246
        %v263 = vmul.f32 %v262, %v255
        %v264 = vstv %s248
        %v265 = vmul.f32 %v264, %v256
        %v266 = vadd.f32 %v263, %v265
        %v267 = vstv %s250
        %v268 = vmul.f32 %v267, %v255
        %v269 = vstv %s252
        %v270 = vmul.f32 %v269, %v256
        %v271 = vadd.f32 %v268, %v270
        %v272 = vstv %s254
        %v273 = vmul.f32 %v272, %v240
        %s274 = sadd.s32 %s241, 8
        %s275 = sld [smem:[#allocation2 + %s274]]
        %s276 = sadd.s32 %s241, 9
        %s277 = sld [smem:[#allocation2 + %s276]]
        %s278 = sadd.s32 %s241, 10
        %s279 = sld [smem:[#allocation2 + %s278]]
        %s280 = sadd.s32 %s241, 11
        %s281 = sld [smem:[#allocation2 + %s280]]
        %s282 = sadd.s32 %s241, 12
        %s283 = sld [smem:[#allocation2 + %s282]]
        %s284 = sadd.s32 %s241, 13
        %s285 = sld [smem:[#allocation2 + %s284]]
        %v286 = vstv %s275
        %v287 = vmul.f32 %v286, %v240
        %v288 = vadd.f32 %v287, %v261
        %v289 = vstv %s277
        %v290 = vadd.f32 %v288, %v289
        %v291 = vstv %s279
        %v292 = vmul.f32 %v291, %v240
        %v293 = vadd.f32 %v292, %v266
        %v294 = vstv %s281
        %v295 = vadd.f32 %v293, %v294
        %v296 = vstv %s283
        %v297 = vmul.f32 %v296, %v271
        %v298 = vadd.f32 %v297, %v273
        %v299 = vstv %s285
        %v300 = vadd.f32 %v298, %v299
        %v301 = vmax.f32 %v300, 0.01
        %v302 = vrcp.pop %v301
        %v303 = vmul.f32 %v301, %v302
        %v304 = vsub.f32 2.0, %v303
        %v305 = vmul.f32 %v302, %v304
        %v306 = vmul.f32 %v290, %v305
        %v307 = vmax.f32 %v306, -2.0
        %v308 = vmin.f32 %v307, 2.0
        %v309 = vmul.f32 %v295, %v305
        %v310 = vmax.f32 %v309, -2.0
        %v311 = vmin.f32 %v310, 2.0
        %v312 = vsub.f32 %v308, %v237
        %313 = vst [vmem:[%s236] sm:$0xff] %v312
        %v314 = vsub.f32 %v311, %v239
        %s315 = scalar_lea.vmem %s236, 8 [#allocation9]
        %316 = vst [vmem:[%s315] sm:$0xff] %v314
        %s317 = sadd.s32 %s241, 14
        %s318 = sld [smem:[#allocation2 + %s317]]
        %s319 = sadd.s32 %s241, 15
        %s320 = sld [smem:[#allocation2 + %s319]]
        %s321 = sadd.s32 %s241, 16
        %s322 = sld [smem:[#allocation2 + %s321]]
        %s323 = sadd.s32 %s241, 17
        %s324 = sld [smem:[#allocation2 + %s323]]
        %s325 = sadd.s32 %s241, 18
        %s326 = sld [smem:[#allocation2 + %s325]]
        %s327 = sadd.s32 %s241, 19
        %s328 = sld [smem:[#allocation2 + %s327]]
        %v329 = vstv %s318
        %v330 = vmul.f32 %v329, %v240
        %v331 = vadd.f32 %v330, %v261
        %v332 = vstv %s320
        %v333 = vadd.f32 %v331, %v332
        %v334 = vstv %s322
        %v335 = vmul.f32 %v334, %v240
        %v336 = vadd.f32 %v335, %v266
        %v337 = vstv %s324
        %v338 = vadd.f32 %v336, %v337
        %v339 = vstv %s326
        %v340 = vmul.f32 %v339, %v271
        %v341 = vadd.f32 %v340, %v273
        %v342 = vstv %s328
        %v343 = vadd.f32 %v341, %v342
        %v344 = vmax.f32 %v343, 0.01
        %v345 = vrcp.pop %v344
        %v346 = vmul.f32 %v344, %v345
        %v347 = vsub.f32 2.0, %v346
        %v348 = vmul.f32 %v345, %v347
        %v349 = vmul.f32 %v333, %v348
        %v350 = vmax.f32 %v349, -2.0
        %v351 = vmin.f32 %v350, 2.0
        %v352 = vmul.f32 %v338, %v348
        %v353 = vmax.f32 %v352, -2.0
        %v354 = vmin.f32 %v353, 2.0
        %v355 = vsub.f32 %v351, %v237
        %s356 = scalar_lea.vmem %s236, 16 [#allocation9]
        %357 = vst [vmem:[%s356] sm:$0xff] %v355
        %v358 = vsub.f32 %v354, %v239
        %s359 = scalar_lea.vmem %s236, 24 [#allocation9]
        %360 = vst [vmem:[%s359] sm:$0xff] %v358
        %s361 = sadd.s32 %s241, 20
        %s362 = sld [smem:[#allocation2 + %s361]]
        %s363 = sadd.s32 %s241, 21
        %s364 = sld [smem:[#allocation2 + %s363]]
        %s365 = sadd.s32 %s241, 22
        %s366 = sld [smem:[#allocation2 + %s365]]
        %s367 = sadd.s32 %s241, 23
        %s368 = sld [smem:[#allocation2 + %s367]]
        %s369 = sadd.s32 %s241, 24
        %s370 = sld [smem:[#allocation2 + %s369]]
        %s371 = sadd.s32 %s241, 25
        %s372 = sld [smem:[#allocation2 + %s371]]
        %v373 = vstv %s362
        %v374 = vmul.f32 %v373, %v240
        %v375 = vadd.f32 %v374, %v261
        %v376 = vstv %s364
        %v377 = vadd.f32 %v375, %v376
        %v378 = vstv %s366
        %v379 = vmul.f32 %v378, %v240
        %v380 = vadd.f32 %v379, %v266
        %v381 = vstv %s368
        %v382 = vadd.f32 %v380, %v381
        %v383 = vstv %s370
        %v384 = vmul.f32 %v383, %v271
        %v385 = vadd.f32 %v384, %v273
        %v386 = vstv %s372
        %v387 = vadd.f32 %v385, %v386
        %v388 = vmax.f32 %v387, 0.01
        %v389 = vrcp.pop %v388
        %v390 = vmul.f32 %v388, %v389
        %v391 = vsub.f32 2.0, %v390
        %v392 = vmul.f32 %v389, %v391
        %v393 = vmul.f32 %v377, %v392
        %v394 = vmax.f32 %v393, -2.0
        %v395 = vmin.f32 %v394, 2.0
        %v396 = vmul.f32 %v382, %v392
        %v397 = vmax.f32 %v396, -2.0
        %v398 = vmin.f32 %v397, 2.0
        %v399 = vsub.f32 %v395, %v237
        %s400 = scalar_lea.vmem %s236, 32 [#allocation9]
        %401 = vst [vmem:[%s400] sm:$0xff] %v399
        %v402 = vsub.f32 %v398, %v239
        %s403 = scalar_lea.vmem %s236, 40 [#allocation9]
        %404 = vst [vmem:[%s403] sm:$0xff] %v402
        %s405 = sadd.s32 %s241, 26
        %s406 = sld [smem:[#allocation2 + %s405]]
        %s407 = sadd.s32 %s241, 27
        %s408 = sld [smem:[#allocation2 + %s407]]
        %s409 = sadd.s32 %s241, 28
        %s410 = sld [smem:[#allocation2 + %s409]]
        %s411 = sadd.s32 %s241, 29
        %s412 = sld [smem:[#allocation2 + %s411]]
        %s413 = sadd.s32 %s241, 30
        %s414 = sld [smem:[#allocation2 + %s413]]
        %s415 = sadd.s32 %s241, 31
        %s416 = sld [smem:[#allocation2 + %s415]]
        %v417 = vstv %s406
        %v418 = vmul.f32 %v417, %v240
        %v419 = vadd.f32 %v418, %v261
        %v420 = vstv %s408
        %v421 = vadd.f32 %v419, %v420
        %v422 = vstv %s410
        %v423 = vmul.f32 %v422, %v240
        %v424 = vadd.f32 %v423, %v266
        %v425 = vstv %s412
        %v426 = vadd.f32 %v424, %v425
        %v427 = vstv %s414
        %v428 = vmul.f32 %v427, %v271
        %v429 = vadd.f32 %v428, %v273
        %v430 = vstv %s416
        %v431 = vadd.f32 %v429, %v430
        %v432 = vmax.f32 %v431, 0.01
        %v433 = vrcp.pop %v432
        %v434 = vmul.f32 %v432, %v433
        %v435 = vsub.f32 2.0, %v434
        %v436 = vmul.f32 %v433, %v435
        %v437 = vmul.f32 %v421, %v436
        %v438 = vmax.f32 %v437, -2.0
        %v439 = vmin.f32 %v438, 2.0
        %v440 = vmul.f32 %v426, %v436
        %v441 = vmax.f32 %v440, -2.0
        %v442 = vmin.f32 %v441, 2.0
        %v443 = vsub.f32 %v439, %v237
        %s444 = scalar_lea.vmem %s236, 48 [#allocation9]
        %445 = vst [vmem:[%s444] sm:$0xff] %v443
        %v446 = vsub.f32 %v442, %v239
        %s447 = scalar_lea.vmem %s236, 56 [#allocation9]
        %448 = vst [vmem:[%s447] sm:$0xff] %v446
        %s449 = sand.u32 %s119, 1
        %s450 = scalar_lea.sflag [#allocation4], %s449
        %s451 = sand.u32 %s119, 1
        %s452 = smul.addr %s451, 64
        %s453 = scalar_lea.vmem [#allocation9], %s452
        // Predicated region
        $region45: #{tpu_custom_call.1} parent=31 // pred_check
          %p454 = pneg %p129
        $region46: #{tpu_custom_call.1} parent=31 // pred_check_branch
          %456 = sbr.rel (%p454) target = $region48
        $region47: #{tpu_custom_call.1} parent=31 // pred_region
          %s458 = ssub.s32 1024, 1024
          %459 = vsyncadd %s450, %s458
          %s460 = smul.addr %s27, 8
          %s461 = sadd.s32 %s26, %s460
          %s462 = smul.addr %s461, 128
          %s463 = scalar_lea.hbm %s3, %s462
          %s464 = sshll.u32 %s453, 4
          %s465 = int_to_ptr.vmem [resolvable:$true] %s464
          %470 = dma.vmem_to_hbm [thread:$0]  %s465, 1024, %s463, %s450, 128, 128, 8
        $region48: #{tpu_custom_call.1} parent=31 // pred_fallthru
          _
      $region32: #{tpu_custom_call.1} parent=5 // pred_fallthru
        _
      %p471 = scmp.le.s32.totalorder 2, %s17
      // Predicated region
      $region49: #{tpu_custom_call.1} parent=5 // pred_check
        %p472 = pneg %p471
      $region50: #{tpu_custom_call.1} parent=5 // pred_check_branch
        %474 = sbr.rel (%p472) target = $region52
      $region51: #{tpu_custom_call.1} parent=5 // pred_region
        %s475 = ssub.s32 %s17, 2
        // Predicated region
        $region53: #{tpu_custom_call.1} parent=51 // pred_check
          %p476 = pneg %p135
        $region54: #{tpu_custom_call.1} parent=51 // pred_check_branch
          %478 = sbr.rel (%p476) target = $region56
        $region55: #{tpu_custom_call.1} parent=51 // pred_region
          %s479 = sand.u32 %s120, 1
          %s480 = scalar_lea.sflag [#allocation4], %s479
          %s481 = sand.u32 %s120, 1
          %s482 = smul.addr %s481, 64
          %s483 = scalar_lea.vmem [#allocation9], %s482
          %484 = dma.done %s480, 1024
        $region56: #{tpu_custom_call.1} parent=51 // pred_fallthru
          _
      $region52: #{tpu_custom_call.1} parent=5 // pred_fallthru
        _
    $region6: #{tpu_custom_call.1} parent=1 // loop_footer
      %s21 = sadd.s32 1, %s17
    $region7: #{tpu_custom_call.1} parent=1 // loop_footer_branch
      %16 = sbr.rel target = $region3
    $region8: #{tpu_custom_call.1} parent=1 // loop_exit
      _
    %485 = vsyncpa [#allocation3], 1
    %s486 = scalar_lea.sflag [#allocation3], 1
    %487 = vsyncpa %s486, 1
    %488 = vsyncpa [#allocation8], 1
    %s489 = scalar_lea.sflag [#allocation8], 1
    %490 = vsyncpa %s489, 1
    %491 = vsyncpa [#allocation4], 1
    %s492 = scalar_lea.sflag [#allocation4], 1
    %493 = vsyncpa %s492, 1
    %494 = vsyncpa [#allocation5], 1
    %s495 = scalar_lea.sflag [#allocation5], 1
    %496 = vsyncpa %s495, 1

</llo_original>
